<compile_context>
chip_gen: v5e
topology: v5e:2x2
jax: 0.10.0
libtpu: 0.0.40
codegen_flags: <defaults>
</compile_context>

<pallas_src>
import functools

import jax
import jax.numpy as jnp
from jax.experimental import pallas as pl
from jax.experimental.pallas import tpu as pltpu


def _round_up(x, m):
    return ((x + m - 1) // m) * m


def _bottleneck_expand_kernel(x_ref, w1_ref, b1_ref, w2_ref, b2_ref, o_ref):
    # x_ref:  (TM, D) f32 tile of flattened encoder hidden states (cast here)
    # w1_ref: (D,  H) bf16 bottleneck weight (matmul layout)
    # b1_ref: (1,  H) f32
    # w2_ref: (H,  D) bf16 expansion weight
    # b2_ref: (1,  D) f32
    # o_ref:  (TM, D) bf16 (or requested out dtype)
    x = x_ref[...].astype(jnp.bfloat16)                  # VPU cast, hidden under DMA/MXU
    h = jnp.dot(x, w1_ref[...], preferred_element_type=jnp.float32)
    h = h + b1_ref[...]                                   # bias add stays f32 (VPU)
    y = jnp.dot(h.astype(jnp.bfloat16), w2_ref[...],
                preferred_element_type=jnp.float32)
    o_ref[...] = (y + b2_ref[...]).astype(o_ref.dtype)


def prepare_params(w1, b1, w2, b2):
    """One-time preparation of the frozen adapter params (do NOT call per step).

    w1: [D, H], b1: [H]   (bottleneck,  PyTorch weight [H, D] transposed)
    w2: [H, D], b2: [D]   (expansion,   PyTorch weight [D, H] transposed)
    """
    return (
        jnp.asarray(w1, jnp.bfloat16),
        jnp.asarray(b1, jnp.float32).reshape(1, -1),
        jnp.asarray(w2, jnp.bfloat16),
        jnp.asarray(b2, jnp.float32).reshape(1, -1),
    )


@functools.partial(jax.jit, static_argnames=("out_dtype",))
def superposition_translate_states(enc_hidden, w1_b, b1_2d, w2_b, b2_2d,
                                   out_dtype=jnp.bfloat16):
    """decoder_expansion(encoder_bottleneck(enc_hidden)) as one fused kernel.

    enc_hidden: [B, S, D] float32 (encoder hidden states)
    w1_b/b1_2d/w2_b/b2_2d: output of prepare_params (bf16 weights, (1,·) f32 biases)
    returns: [B, S, D] in out_dtype (default bf16, what the decoder consumes)
    """
    B, S, D = enc_hidden.shape
    H = w1_b.shape[1]
    M = B * S

    # Row tile: multiple of 16 (bf16 sublane packing). Large tiles (512-1024)
    # get within ~85% of the HBM roofline; for M > 512 we also make sure the
    # "parallel" row axis produces >= 2 blocks so v7x's two TensorCores both
    # get work. Tiny problems become a single un-gridded block.
    if M <= 512:
        tile_m = _round_up(M, 16)
    else:
        tile_m = min(1024, _round_up(pl.cdiv(M, 2), 16))
    grid = (pl.cdiv(M, tile_m),)

    x2d = enc_hidden.reshape(M, D)   # f32; bf16 cast happens inside the kernel
    out_bytes = jnp.dtype(out_dtype).itemsize

    cost = pl.CostEstimate(
        flops=4 * M * D * H,                          # two GEMMs, 2*M*D*H each
        transcendentals=0,
        bytes_accessed=(M * D * 4                     # x (f32) in
                        + M * D * out_bytes           # y out
                        + D * H * 2 + H * D * 2       # weights (bf16)
                        + (H + D) * 4),               # biases (f32)
    )

    out2d = pl.pallas_call(
        _bottleneck_expand_kernel,
        out_shape=jax.ShapeDtypeStruct((M, D), out_dtype),
        grid_spec=pltpu.PrefetchScalarGridSpec(
            num_scalar_prefetch=0,
            grid=grid,
            in_specs=[
                pl.BlockSpec((tile_m, D), lambda i: (i, 0)),  # x row tile (f32)
                pl.BlockSpec((D, H), lambda i: (0, 0)),       # w1 (VMEM resident)
                pl.BlockSpec((1, H), lambda i: (0, 0)),       # b1
                pl.BlockSpec((H, D), lambda i: (0, 0)),       # w2 (VMEM resident)
                pl.BlockSpec((1, D), lambda i: (0, 0)),       # b2
            ],
            out_specs=pl.BlockSpec((tile_m, D), lambda i: (i, 0)),
        ),
        compiler_params=pltpu.CompilerParams(
            dimension_semantics=("parallel",),   # megacore-shardable on v7x
        ),
        cost_estimate=cost,
    )(x2d, w1_b, b1_2d, w2_b, b2_2d)

    return out2d.reshape(B, S, D)


def _init_linear(key, in_features, out_features):
    """PyTorch-style Linear init: U(-1/sqrt(fan_in), 1/sqrt(fan_in)).

    Returns weight in matmul layout [in_features, out_features] and bias [out_features].
    """
    kw, kb = jax.random.split(key)
    bound = 1.0 / jnp.sqrt(jnp.float32(in_features))
    w = jax.random.uniform(kw, (in_features, out_features), jnp.float32, -bound, bound)
    b = jax.random.uniform(kb, (out_features,), jnp.float32, -bound, bound)
    return w, b


def reference_forward_f32(enc_hidden, w1, b1, w2, b2):
    h = jnp.einsum("bsd,dh->bsh", enc_hidden, w1) + b1
    return jnp.einsum("bsh,hd->bsd", h, w2) + b2


def reference_forward_bf16(enc_hidden, w1, b1, w2, b2):
    # Same bf16-operand / f32-accumulation recipe as the kernel.
    x = enc_hidden.astype(jnp.bfloat16)
    h = jnp.einsum("bsd,dh->bsh", x, w1.astype(jnp.bfloat16),
                   preferred_element_type=jnp.float32) + b1
    return jnp.einsum("bsh,hd->bsd", h.astype(jnp.bfloat16),
                      w2.astype(jnp.bfloat16),
                      preferred_element_type=jnp.float32) + b2


if __name__ == "__main__":
    # Small shapes consistent with the module's forward: batch=2, seq=8,
    # d_model=256, bottleneck hidden=128 (MarianMT d_model=512; scaled down).
    B, S, D, H = 2, 8, 256, 128

    key = jax.random.PRNGKey(0)
    k_x, k_l1, k_l2 = jax.random.split(key, 3)

    # Synthetic encoder output (stands in for base_model.get_encoder()(...)[0]).
    enc_hidden = jax.random.normal(k_x, (B, S, D), jnp.float32)

    w1, b1 = _init_linear(k_l1, D, H)   # encoder_bottleneck: Linear(D -> H)
    w2, b2 = _init_linear(k_l2, H, D)   # decoder_expansion:  Linear(H -> D)

    # Frozen params: convert once, outside the jitted hot path.
    params = prepare_params(w1, b1, w2, b2)

    out = superposition_translate_states(enc_hidden, *params)
    out = jax.block_until_ready(out)
    assert out.shape == (B, S, D)
    assert out.dtype == jnp.bfloat16

    out_f32 = out.astype(jnp.float32)

    # Tight check vs a reference using the same bf16-operand / f32-accum recipe
    # (remaining difference = the final bf16 output rounding only).
    ref_bf16 = reference_forward_bf16(enc_hidden, w1, b1, w2, b2)
    assert jnp.allclose(out_f32, ref_bf16, atol=2e-2, rtol=2e-2), "mismatch vs bf16 reference"

    # Loose check vs the module's full-f32 semantics (difference = bf16 rounding only).
    ref_f32 = reference_forward_f32(enc_hidden, w1, b1, w2, b2)
    assert jnp.allclose(out_f32, ref_f32, atol=6e-2, rtol=6e-2), "mismatch vs f32 reference"

    print("KERNEL_OK")
</pallas_src>

<mosaic_0001>
module attributes {stable_mosaic.version = 11 : i64} {
  func.func @_bottleneck_expand_kernel(%arg0: i32, %arg1: memref<16x256xf32, #tpu.memory_space<vmem>>, %arg2: memref<256x128xbf16, #tpu.memory_space<vmem>>, %arg3: memref<1x128xf32, #tpu.memory_space<vmem>>, %arg4: memref<128x256xbf16, #tpu.memory_space<vmem>>, %arg5: memref<1x256xf32, #tpu.memory_space<vmem>>, %arg6: memref<16x256xbf16, #tpu.memory_space<vmem>>) attributes {dimension_semantics = [#tpu.dimension_semantics<parallel>], iteration_bounds = array<i64: 1>, scalar_prefetch = 0 : i64, scratch_operands = 0 : i64, tpu.core_type = #tpu.core_type<tc>, window_params = [{transform_indices = @transform_0, window_bounds = array<i64: 16, 256>}, {pipeline_mode = #tpu.pipeline_mode<synchronous>, transform_indices = @transform_1, window_bounds = array<i64: 256, 128>}, {pipeline_mode = #tpu.pipeline_mode<synchronous>, transform_indices = @transform_2, window_bounds = array<i64: 1, 128>}, {pipeline_mode = #tpu.pipeline_mode<synchronous>, transform_indices = @transform_3, window_bounds = array<i64: 128, 256>}, {pipeline_mode = #tpu.pipeline_mode<synchronous>, transform_indices = @transform_4, window_bounds = array<i64: 1, 256>}, {transform_indices = @transform_5, window_bounds = array<i64: 16, 256>}]} {
    %c0 = arith.constant 0 : index
    %c0_0 = arith.constant 0 : index
    %0 = vector.load %arg1[%c0, %c0_0] : memref<16x256xf32, #tpu.memory_space<vmem>>, vector<16x256xf32>
    %1 = arith.truncf %0 : vector<16x256xf32> to vector<16x256xbf16>
    %c0_1 = arith.constant 0 : index
    %c0_2 = arith.constant 0 : index
    %2 = vector.load %arg2[%c0_1, %c0_2] : memref<256x128xbf16, #tpu.memory_space<vmem>>, vector<256x128xbf16>
    %cst = arith.constant dense<0.000000e+00> : vector<16x128xf32>
    %3 = tpu.matmul %1, %2, %cst {dimension_numbers = #tpu.dot_dimension_numbers<[1], [0], [0], [1], [0, 0, 1, 1], [], []>} : vector<16x256xbf16>, vector<256x128xbf16>, vector<16x128xf32> -> vector<16x128xf32>
    %c0_3 = arith.constant 0 : index
    %c0_4 = arith.constant 0 : index
    %4 = vector.load %arg3[%c0_3, %c0_4] : memref<1x128xf32, #tpu.memory_space<vmem>>, vector<1x128xf32>
    %5 = vector.broadcast %4 : vector<1x128xf32> to vector<16x128xf32>
    %6 = arith.addf %3, %5 : vector<16x128xf32>
    %7 = arith.truncf %6 : vector<16x128xf32> to vector<16x128xbf16>
    %c0_5 = arith.constant 0 : index
    %c0_6 = arith.constant 0 : index
    %8 = vector.load %arg4[%c0_5, %c0_6] : memref<128x256xbf16, #tpu.memory_space<vmem>>, vector<128x256xbf16>
    %cst_7 = arith.constant dense<0.000000e+00> : vector<16x256xf32>
    %9 = tpu.matmul %7, %8, %cst_7 {dimension_numbers = #tpu.dot_dimension_numbers<[1], [0], [0], [1], [0, 0, 1, 1], [], []>} : vector<16x128xbf16>, vector<128x256xbf16>, vector<16x256xf32> -> vector<16x256xf32>
    %c0_8 = arith.constant 0 : index
    %c0_9 = arith.constant 0 : index
    %10 = vector.load %arg5[%c0_8, %c0_9] : memref<1x256xf32, #tpu.memory_space<vmem>>, vector<1x256xf32>
    %11 = vector.broadcast %10 : vector<1x256xf32> to vector<16x256xf32>
    %12 = arith.addf %9, %11 : vector<16x256xf32>
    %13 = arith.truncf %12 : vector<16x256xf32> to vector<16x256xbf16>
    %c0_10 = arith.constant 0 : index
    %c0_11 = arith.constant 0 : index
    %14 = vector.load %arg6[%c0_10, %c0_11] : memref<16x256xbf16, #tpu.memory_space<vmem>>, vector<16x256xbf16>
    tpu.vector_store %arg6[%c0_10, %c0_11], %13 {strides = array<i32>} : memref<16x256xbf16, #tpu.memory_space<vmem>>, vector<16x256xbf16>,
    return
  }
  func.func @transform_0(%arg0: i32) -> (i32, i32) {
    %c0_i32 = arith.constant 0 : i32
    %c0_i32_0 = arith.constant 0 : i32
    return %arg0, %c0_i32 : i32, i32
  }
  func.func @transform_1(%arg0: i32) -> (i32, i32) {
    %c0_i32 = arith.constant 0 : i32
    %c0_i32_0 = arith.constant 0 : i32
    %c0_i32_1 = arith.constant 0 : i32
    return %c0_i32, %c0_i32_0 : i32, i32
  }
  func.func @transform_2(%arg0: i32) -> (i32, i32) {
    %c0_i32 = arith.constant 0 : i32
    %c0_i32_0 = arith.constant 0 : i32
    %c0_i32_1 = arith.constant 0 : i32
    return %c0_i32, %c0_i32_0 : i32, i32
  }
  func.func @transform_3(%arg0: i32) -> (i32, i32) {
    %c0_i32 = arith.constant 0 : i32
    %c0_i32_0 = arith.constant 0 : i32
    %c0_i32_1 = arith.constant 0 : i32
    return %c0_i32, %c0_i32_0 : i32, i32
  }
  func.func @transform_4(%arg0: i32) -> (i32, i32) {
    %c0_i32 = arith.constant 0 : i32
    %c0_i32_0 = arith.constant 0 : i32
    %c0_i32_1 = arith.constant 0 : i32
    return %c0_i32, %c0_i32_0 : i32, i32
  }
  func.func @transform_5(%arg0: i32) -> (i32, i32) {
    %c0_i32 = arith.constant 0 : i32
    %c0_i32_0 = arith.constant 0 : i32
    return %arg0, %c0_i32 : i32, i32
  }
}

</mosaic_0001>

<llo_original>
// kernel: superposition_translate_states.1
$region0: #{superposition_translate_states.1}
  #allocation0 [shape = 'u32[]', space=smem, size = 0x4, offset = 0x4, fixed_abs, tag = 'smem constant byte address 0x4 - core index']
  #allocation1 [shape = 'u32[72,128]{1,0:T(1,128)}', space=vmem, size = 0x9000, scoped, tag = 'internal scratch']
  %s0 = inlined_call_operand.hbm [shape: f32[16,256], index: 0, kind: input, shape index: {}]
  %s1 = inlined_call_operand.hbm [shape: bf16[256,128], index: 1, kind: input, shape index: {}]
  %s2 = inlined_call_operand.vmem [shape: f32[1,128], index: 2, kind: input, shape index: {}]
  %s3 = inlined_call_operand.hbm [shape: bf16[128,256], index: 3, kind: input, shape index: {}]
  %s4 = inlined_call_operand.vmem [shape: f32[1,256], index: 4, kind: input, shape index: {}]
  %s5 = inlined_call_operand.hbm [shape: bf16[16,256], index: 5, kind: output, shape index: {}]
  %s6 = sld [smem:[#allocation0]]
  $region42: #{superposition_translate_states.1} parent=0
    _
  %s8 = ssub.s32 1, %s6
  %s9 = scalar_select 0, %s8, %s6
  $region1: #{superposition_translate_states.1} parent=0
    #allocation2 [shape = 'u8[16384]{0}', space=vmem, size = 0x4000, scoped, tag = 'input window, operand 0, single buffered']
    #allocation3 [shape = 's32[1]{0}', space=sflag, size = 0x4, scoped, tag = 'scoped memory for superposition_translate_states.1']
    #allocation4 [shape = 's32[1]{0}', space=sflag, size = 0x4, scoped, tag = 'scoped memory for superposition_translate_states.1']
    #allocation5 [shape = 'u8[65536]{0}', space=vmem, size = 0x10000, scoped, tag = 'input window, operand 1, single buffered']
    #allocation6 [shape = 's32[1]{0}', space=sflag, size = 0x4, scoped, tag = 'scoped memory for superposition_translate_states.1']
    #allocation7 [shape = 'u8[65536]{0}', space=vmem, size = 0x10000, scoped, tag = 'input window, operand 3, single buffered']
    #allocation8 [shape = 'u8[8192]{0}', space=vmem, size = 0x2000, scoped, tag = 'output window, operand 0, single buffered']
    %10 = vsyncpa [#allocation3], 0
    %11 = vsyncpa [#allocation6], 0
    %12 = vsyncpa [#allocation4], 0
    // Predicated region
    $region2: #{superposition_translate_states.1} parent=1 // pred_check
      _
    $region3: #{superposition_translate_states.1} parent=1 // pred_check_branch
      %14 = sbr.rel (0) target = $region5
    $region4: #{superposition_translate_states.1} parent=1 // pred_region
      %16 = vsyncadd [#allocation3], 0
      %s17 = sshll.u32 %s0, 4
      %s18 = int_to_ptr.hbm [resolvable:$true] %s17
      %s19 = sshll.u32 [#allocation2], 4
      %s20 = int_to_ptr.vmem [resolvable:$true] %s19
      %25 = dma.hbm_to_vmem [thread:$0]  %s18, 512, %s20, [#allocation3], 256, 256, 16
    $region5: #{superposition_translate_states.1} parent=1 // pred_fallthru
      _
    // Predicated region
    $region6: #{superposition_translate_states.1} parent=1 // pred_check
      _
    $region7: #{superposition_translate_states.1} parent=1 // pred_check_branch
      %27 = sbr.rel (0) target = $region9
    $region8: #{superposition_translate_states.1} parent=1 // pred_region
      %29 = vsyncadd [#allocation6], 0
      %s30 = sshll.u32 %s1, 4
      %s31 = int_to_ptr.hbm [resolvable:$true] %s30
      %s32 = sshll.u32 [#allocation5], 4
      %s33 = int_to_ptr.vmem [resolvable:$true] %s32
      %38 = dma.hbm_to_vmem [thread:$0]  %s31, 2048, %s33, [#allocation6], 64, 64, 4
    $region9: #{superposition_translate_states.1} parent=1 // pred_fallthru
      _
    // Predicated region
    $region10: #{superposition_translate_states.1} parent=1 // pred_check
      _
    $region11: #{superposition_translate_states.1} parent=1 // pred_check_branch
      %40 = sbr.rel (0) target = $region13
    $region12: #{superposition_translate_states.1} parent=1 // pred_region
      _
    $region13: #{superposition_translate_states.1} parent=1 // pred_fallthru
      _
    // Predicated region
    $region14: #{superposition_translate_states.1} parent=1 // pred_check
      _
    $region15: #{superposition_translate_states.1} parent=1 // pred_check_branch
      %42 = sbr.rel (0) target = $region17
    $region16: #{superposition_translate_states.1} parent=1 // pred_region
      %44 = vsyncadd [#allocation6], 0
      %s45 = sshll.u32 %s3, 4
      %s46 = int_to_ptr.hbm [resolvable:$true] %s45
      %s47 = sshll.u32 [#allocation7], 4
      %s48 = int_to_ptr.vmem [resolvable:$true] %s47
      %53 = dma.hbm_to_vmem [thread:$0]  %s46, 2048, %s48, [#allocation6], 128, 128, 8
    $region17: #{superposition_translate_states.1} parent=1 // pred_fallthru
      _
    // Predicated region
    $region18: #{superposition_translate_states.1} parent=1 // pred_check
      _
    $region19: #{superposition_translate_states.1} parent=1 // pred_check_branch
      %55 = sbr.rel (0) target = $region21
    $region20: #{superposition_translate_states.1} parent=1 // pred_region
      _
    $region21: #{superposition_translate_states.1} parent=1 // pred_fallthru
      _
    // Predicated region
    $region22: #{superposition_translate_states.1} parent=1 // pred_check
      _
    $region23: #{superposition_translate_states.1} parent=1 // pred_check_branch
      %57 = sbr.rel (0) target = $region25
    $region24: #{superposition_translate_states.1} parent=1 // pred_region
      %59 = dma.done [#allocation3], 512
    $region25: #{superposition_translate_states.1} parent=1 // pred_fallthru
      _
    // Predicated region
    $region26: #{superposition_translate_states.1} parent=1 // pred_check
      _
    $region27: #{superposition_translate_states.1} parent=1 // pred_check_branch
      %61 = sbr.rel (0) target = $region29
    $region28: #{superposition_translate_states.1} parent=1 // pred_region
      %63 = dma.done [#allocation6], 2048
    $region29: #{superposition_translate_states.1} parent=1 // pred_fallthru
      _
    // Predicated region
    $region30: #{superposition_translate_states.1} parent=1 // pred_check
      _
    $region31: #{superposition_translate_states.1} parent=1 // pred_check_branch
      %65 = sbr.rel (0) target = $region33
    $region32: #{superposition_translate_states.1} parent=1 // pred_region
      %67 = dma.done [#allocation6], 2048
    $region33: #{superposition_translate_states.1} parent=1 // pred_fallthru
      _
    %v68 = vld [vmem:[#allocation2] sm:$0xff]
    %v69 = vld [vmem:[#allocation2 + $0x8] sm:$0xff]
    %v70 = vld [vmem:[#allocation2 + $0x10] sm:$0xff]
    %v71 = vld [vmem:[#allocation2 + $0x18] sm:$0xff]
    %v72 = vpack.c.bf16 %v70, %v68
    %v73 = vpack.c.bf16 %v71, %v69
    %v74 = vld [vmem:[#allocation5] sm:$0xf]
    %v75 = vld [vmem:[#allocation5 + $0x4] sm:$0xf]
    %v76 = vld [vmem:[#allocation5 + $0x8] sm:$0xf]
    %v77 = vld [vmem:[#allocation5 + $0xc] sm:$0xf]
    %v78 = vld [vmem:[#allocation5 + $0x10] sm:$0xf]
    %v79 = vld [vmem:[#allocation5 + $0x14] sm:$0xf]
    %v80 = vld [vmem:[#allocation5 + $0x18] sm:$0xf]
    %v81 = vld [vmem:[#allocation5 + $0x1c] sm:$0xf]
    %v82 = vld [vmem:[#allocation5 + $0x20] sm:$0xf]
    %v83 = vld [vmem:[#allocation5 + $0x24] sm:$0xf]
    %v84 = vld [vmem:[#allocation5 + $0x28] sm:$0xf]
    %v85 = vld [vmem:[#allocation5 + $0x2c] sm:$0xf]
    %v86 = vld [vmem:[#allocation5 + $0x30] sm:$0xf]
    %v87 = vld [vmem:[#allocation5 + $0x34] sm:$0xf]
    %v88 = vld [vmem:[#allocation5 + $0x38] sm:$0xf]
    %v89 = vld [vmem:[#allocation5 + $0x3c] sm:$0xf]
    %v90 = vld [vmem:[#allocation5 + $0x40] sm:$0xf]
    %v91 = vld [vmem:[#allocation5 + $0x44] sm:$0xf]
    %v92 = vld [vmem:[#allocation5 + $0x48] sm:$0xf]
    %v93 = vld [vmem:[#allocation5 + $0x4c] sm:$0xf]
    %v94 = vld [vmem:[#allocation5 + $0x50] sm:$0xf]
    %v95 = vld [vmem:[#allocation5 + $0x54] sm:$0xf]
    %v96 = vld [vmem:[#allocation5 + $0x58] sm:$0xf]
    %v97 = vld [vmem:[#allocation5 + $0x5c] sm:$0xf]
    %v98 = vld [vmem:[#allocation5 + $0x60] sm:$0xf]
    %v99 = vld [vmem:[#allocation5 + $0x64] sm:$0xf]
    %v100 = vld [vmem:[#allocation5 + $0x68] sm:$0xf]
    %v101 = vld [vmem:[#allocation5 + $0x6c] sm:$0xf]
    %v102 = vld [vmem:[#allocation5 + $0x70] sm:$0xf]
    %v103 = vld [vmem:[#allocation5 + $0x74] sm:$0xf]
    %v104 = vld [vmem:[#allocation5 + $0x78] sm:$0xf]
    %v105 = vld [vmem:[#allocation5 + $0x7c] sm:$0xf]
    %v106 = vld [vmem:[%s2] sm:$0x1]
    %v108 = vperm.slane %v106, 0
    %v142 = vunpack.c.l.b16 %v74
    %v143 = vunpack.c.l.b16 %v75
    %v144 = vunpack.c.l.b16 %v76
    %v145 = vunpack.c.l.b16 %v77
    %v146 = vunpack.c.l.b16 %v78
    %v147 = vunpack.c.l.b16 %v79
    %v148 = vunpack.c.l.b16 %v80
    %v149 = vunpack.c.l.b16 %v81
    %v150 = vunpack.c.l.b16 %v82
    %v151 = vunpack.c.l.b16 %v83
    %v152 = vunpack.c.l.b16 %v84
    %v153 = vunpack.c.l.b16 %v85
    %v154 = vunpack.c.l.b16 %v86
    %v155 = vunpack.c.l.b16 %v87
    %v156 = vunpack.c.l.b16 %v88
    %v157 = vunpack.c.l.b16 %v89
    %v158 = vunpack.c.l.b16 %v90
    %v159 = vunpack.c.l.b16 %v91
    %v160 = vunpack.c.l.b16 %v92
    %v161 = vunpack.c.l.b16 %v93
    %v162 = vunpack.c.l.b16 %v94
    %v163 = vunpack.c.l.b16 %v95
    %v164 = vunpack.c.l.b16 %v96
    %v165 = vunpack.c.l.b16 %v97
    %v166 = vunpack.c.l.b16 %v98
    %v167 = vunpack.c.l.b16 %v99
    %v168 = vunpack.c.l.b16 %v100
    %v169 = vunpack.c.l.b16 %v101
    %v170 = vunpack.c.l.b16 %v102
    %v171 = vunpack.c.l.b16 %v103
    %v172 = vunpack.c.l.b16 %v104
    %v173 = vunpack.c.l.b16 %v105
    %v174 = vpack.c.b16 %v143, %v142
    %v175 = vpack.c.b16 %v145, %v144
    %v176 = vpack.c.b16 %v147, %v146
    %v177 = vpack.c.b16 %v149, %v148
    %v178 = vpack.c.b16 %v151, %v150
    %v179 = vpack.c.b16 %v153, %v152
    %v180 = vpack.c.b16 %v155, %v154
    %v181 = vpack.c.b16 %v157, %v156
    %v182 = vpack.c.b16 %v159, %v158
    %v183 = vpack.c.b16 %v161, %v160
    %v184 = vpack.c.b16 %v163, %v162
    %v185 = vpack.c.b16 %v165, %v164
    %v186 = vpack.c.b16 %v167, %v166
    %v187 = vpack.c.b16 %v169, %v168
    %v188 = vpack.c.b16 %v171, %v170
    %v189 = vpack.c.b16 %v173, %v172
    %206 = vmatpush.bf16.msra.mxu0 %v181
    %207 = vmatpush.bf16.msra.mxu0 %v180
    %208 = vmatpush.bf16.msra.mxu0 %v179
    %209 = vmatpush.bf16.msra.mxu0 %v178
    %210 = vmatpush.bf16.msra.mxu0 %v177
    %211 = vmatpush.bf16.msra.mxu0 %v176
    %212 = vmatpush.bf16.msra.mxu0 %v175
    %213 = vmatpush.bf16.msra.mxu0 %v174
    %214 = vmatmul.bf16.gmra.mxu0 %v72
    %v215 = vpop.f32.mrf.mxu0
    %v216 = vadd.f32 %v108, %v215
    %v217 = vpop.f32.mrf.mxu0
    %v218 = vadd.f32 %v108, %v217
    %219 = vdwg.mxu0
    %220 = vmatpush.bf16.msra.mxu0 %v189
    %221 = vmatpush.bf16.msra.mxu0 %v188
    %222 = vmatpush.bf16.msra.mxu0 %v187
    %223 = vmatpush.bf16.msra.mxu0 %v186
    %224 = vmatpush.bf16.msra.mxu0 %v185
    %225 = vmatpush.bf16.msra.mxu0 %v184
    %226 = vmatpush.bf16.msra.mxu0 %v183
    %227 = vmatpush.bf16.msra.mxu0 %v182
    %228 = vmatmul.bf16.gmra.mxu0 %v73
    %v229 = vpop.f32.mrf.mxu0
    %v230 = vadd.f32 %v216, %v229
    %v231 = vpop.f32.mrf.mxu0
    %v232 = vadd.f32 %v218, %v231
    %233 = vdwg.mxu0
    %v234 = vpack.c.bf16 %v232, %v230
    %v235 = vld [vmem:[#allocation7] sm:$0xff]
    %v236 = vld [vmem:[#allocation7 + $0x8] sm:$0xff]
    %v237 = vld [vmem:[#allocation7 + $0x10] sm:$0xff]
    %v238 = vld [vmem:[#allocation7 + $0x18] sm:$0xff]
    %v239 = vld [vmem:[#allocation7 + $0x20] sm:$0xff]
    %v240 = vld [vmem:[#allocation7 + $0x28] sm:$0xff]
    %v241 = vld [vmem:[#allocation7 + $0x30] sm:$0xff]
    %v242 = vld [vmem:[#allocation7 + $0x38] sm:$0xff]
    %v243 = vld [vmem:[#allocation7 + $0x40] sm:$0xff]
    %v244 = vld [vmem:[#allocation7 + $0x48] sm:$0xff]
    %v245 = vld [vmem:[#allocation7 + $0x50] sm:$0xff]
    %v246 = vld [vmem:[#allocation7 + $0x58] sm:$0xff]
    %v247 = vld [vmem:[#allocation7 + $0x60] sm:$0xff]
    %v248 = vld [vmem:[#allocation7 + $0x68] sm:$0xff]
    %v249 = vld [vmem:[#allocation7 + $0x70] sm:$0xff]
    %v250 = vld [vmem:[#allocation7 + $0x78] sm:$0xff]
    %v251 = vld [vmem:[%s4] sm:$0x3]
    %v253 = vperm.slane %v251, 0
    %v254 = vperm.slane %v251, 1
    %v273 = vunpack.c.l.b16 %v235
    %v274 = vunpack.c.h.b16 %v235
    %v275 = vunpack.c.l.b16 %v236
    %v276 = vunpack.c.h.b16 %v236
    %v277 = vunpack.c.l.b16 %v237
    %v278 = vunpack.c.h.b16 %v237
    %v279 = vunpack.c.l.b16 %v238
    %v280 = vunpack.c.h.b16 %v238
    %v281 = vunpack.c.l.b16 %v239
    %v282 = vunpack.c.h.b16 %v239
    %v283 = vunpack.c.l.b16 %v240
    %v284 = vunpack.c.h.b16 %v240
    %v285 = vunpack.c.l.b16 %v241
    %v286 = vunpack.c.h.b16 %v241
    %v287 = vunpack.c.l.b16 %v242
    %v288 = vunpack.c.h.b16 %v242
    %v289 = vunpack.c.l.b16 %v243
    %v290 = vunpack.c.h.b16 %v243
    %v291 = vunpack.c.l.b16 %v244
    %v292 = vunpack.c.h.b16 %v244
    %v293 = vunpack.c.l.b16 %v245
    %v294 = vunpack.c.h.b16 %v245
    %v295 = vunpack.c.l.b16 %v246
    %v296 = vunpack.c.h.b16 %v246
    %v297 = vunpack.c.l.b16 %v247
    %v298 = vunpack.c.h.b16 %v247
    %v299 = vunpack.c.l.b16 %v248
    %v300 = vunpack.c.h.b16 %v248
    %v301 = vunpack.c.l.b16 %v249
    %v302 = vunpack.c.h.b16 %v249
    %v303 = vunpack.c.l.b16 %v250
    %v304 = vunpack.c.h.b16 %v250
    %v305 = vpack.c.b16 %v275, %v273
    %v306 = vpack.c.b16 %v276, %v274
    %v307 = vpack.c.b16 %v279, %v277
    %v308 = vpack.c.b16 %v280, %v278
    %v309 = vpack.c.b16 %v283, %v281
    %v310 = vpack.c.b16 %v284, %v282
    %v311 = vpack.c.b16 %v287, %v285
    %v312 = vpack.c.b16 %v288, %v286
    %v313 = vpack.c.b16 %v291, %v289
    %v314 = vpack.c.b16 %v292, %v290
    %v315 = vpack.c.b16 %v295, %v293
    %v316 = vpack.c.b16 %v296, %v294
    %v317 = vpack.c.b16 %v299, %v297
    %v318 = vpack.c.b16 %v300, %v298
    %v319 = vpack.c.b16 %v303, %v301
    %v320 = vpack.c.b16 %v304, %v302
    %337 = vmatpush.bf16.msra.mxu0 %v319
    %338 = vmatpush.bf16.msra.mxu0 %v317
    %339 = vmatpush.bf16.msra.mxu0 %v315
    %340 = vmatpush.bf16.msra.mxu0 %v313
    %341 = vmatpush.bf16.msra.mxu0 %v311
    %342 = vmatpush.bf16.msra.mxu0 %v309
    %343 = vmatpush.bf16.msra.mxu0 %v307
    %344 = vmatpush.bf16.msra.mxu0 %v305
    %345 = vmatmul.bf16.gmra.mxu0 %v234
    %v346 = vpop.f32.mrf.mxu0
    %v347 = vadd.f32 %v253, %v346
    %v348 = vpop.f32.mrf.mxu0
    %v349 = vadd.f32 %v253, %v348
    %350 = vdwg.mxu0
    %351 = vmatpush.bf16.msra.mxu0 %v320
    %352 = vmatpush.bf16.msra.mxu0 %v318
    %353 = vmatpush.bf16.msra.mxu0 %v316
    %354 = vmatpush.bf16.msra.mxu0 %v314
    %355 = vmatpush.bf16.msra.mxu0 %v312
    %356 = vmatpush.bf16.msra.mxu0 %v310
    %357 = vmatpush.bf16.msra.mxu0 %v308
    %358 = vmatpush.bf16.msra.mxu0 %v306
    %359 = vmatmul.bf16.gmra.mxu0 %v234
    %v360 = vpop.f32.mrf.mxu0
    %v361 = vadd.f32 %v254, %v360
    %v362 = vpop.f32.mrf.mxu0
    %v363 = vadd.f32 %v254, %v362
    %364 = vdwg.mxu0
    %v365 = vpack.c.bf16 %v361, %v347
    %v366 = vpack.c.bf16 %v363, %v349
    %367 = vst [vmem:[#allocation8] sm:$0xff] %v365
    %368 = vst [vmem:[#allocation8 + $0x8] sm:$0xff] %v366
    // Predicated region
    $region34: #{superposition_translate_states.1} parent=1 // pred_check
      _
    $region35: #{superposition_translate_states.1} parent=1 // pred_check_branch
      %370 = sbr.rel (0) target = $region37
    $region36: #{superposition_translate_states.1} parent=1 // pred_region
      %372 = vsyncadd [#allocation4], 0
      %s373 = sshll.u32 [#allocation8], 4
      %s374 = int_to_ptr.vmem [resolvable:$true] %s373
      %s375 = sshll.u32 %s5, 4
      %s376 = int_to_ptr.hbm [resolvable:$true] %s375
      %381 = dma.vmem_to_hbm [thread:$0]  %s374, 256, %s376, [#allocation4], 128, 128, 8
    $region37: #{superposition_translate_states.1} parent=1 // pred_fallthru
      _
    // Predicated region
    $region38: #{superposition_translate_states.1} parent=1 // pred_check
      _
    $region39: #{superposition_translate_states.1} parent=1 // pred_check_branch
      %383 = sbr.rel (0) target = $region41
    $region40: #{superposition_translate_states.1} parent=1 // pred_region
      %385 = dma.done [#allocation4], 256
    $region41: #{superposition_translate_states.1} parent=1 // pred_fallthru
      _
    %386 = vsyncpa [#allocation3], 1
    %387 = vsyncpa [#allocation6], 1
    %388 = vsyncpa [#allocation4], 1

</llo_original>
